<compile_context>
chip_gen: v5e
topology: v5e:2x2
jax: 0.10.0
libtpu: 0.0.40
codegen_flags: <defaults>
</compile_context>

<pallas_src>
import jax
import jax.numpy as jnp
from jax import lax
from jax.experimental import pallas as pl
from jax.experimental.pallas import tpu as pltpu

_EPS = 1e-5
_TARGET_BLOCK_BYTES = 2 * 1024 * 1024   # ~2 MiB input slab per grid step


def _glsoftmax_kernel(x_ref, o_ref):
    # One lane-dense (row_tile, H) slab, fully resident in VMEM; upcast once to f32.
    x = x_ref[...].astype(jnp.float32)

    # ---- LNorm (parameter-free) over the feature axis ----
    mean = jnp.mean(x, axis=-1, keepdims=True)
    centered = x - mean
    var = jnp.mean(centered * centered, axis=-1, keepdims=True)   # two-pass: no cancellation
    xn = centered * lax.rsqrt(var + _EPS)

    # ---- Softmax over the feature axis (max-shifted, exact reciprocal) ----
    m = jnp.max(xn, axis=-1, keepdims=True)
    e = jnp.exp(xn - m)                        # EUP
    s = jnp.sum(e, axis=-1, keepdims=True)     # XLU lane reduction
    inv_s = 1.0 / s                            # exact; only (row_tile, 1) values
    o_ref[...] = (e * inv_s).astype(o_ref.dtype)


def _tiling_plan(B: int, H: int, dtype) -> tuple[int, int]:
    """Pick (row_tile, vmem_limit_bytes) for a (B, H) input."""
    itemsize = jnp.dtype(dtype).itemsize
    pack = max(8, 32 // itemsize)              # sublane multiple: 8 f32, 16 bf16, 32 int8

    try:
        vmem_cap = int(pltpu.get_tpu_info().vmem_capacity_bytes)
    except Exception:
        vmem_cap = 64 * 1024 * 1024            # conservative fallback (v7x per-TC)
    # 48 MiB on v5e/v6e (128 MiB physical), 32 MiB on v7x (64 MiB physical).
    vmem_limit = int(min(vmem_cap // 2, 48 * 1024 * 1024))

    if B <= pack:
        return B, vmem_limit                   # tiny batch: one full-extent block (always legal)

    # Honest per-row VMEM accounting:
    #   double-buffered in + out tiles:                         2 * 2 * H * itemsize
    #   f32 working set (x upcast, centered, xn, e + row stats): ~5 * H * 4
    per_row_bytes = 4 * H * itemsize + 5 * H * 4
    rows_from_target = _TARGET_BLOCK_BYTES // max(1, H * itemsize)
    rows_from_vmem = (vmem_limit // 2) // max(1, per_row_bytes)   # keep 2x headroom
    cap_rows = max(pack, (min(rows_from_target, rows_from_vmem, 1024) // pack) * pack)
    # TODO(synk): for vocab-sized H where even `pack` rows exceed the budget, tile H on a
    # second "arbitrary" grid axis with online LN + online softmax accumulators.

    # Keep the grid multi-step so double-buffering and v7x 2-TC sharding engage.
    min_steps = 8 if B >= 8 * pack else 2
    if B >= min_steps * pack:
        cap_rows = min(cap_rows, max(pack, ((B // min_steps) // pack) * pack))

    # Prefer an even grid length (balanced split over the 2 TensorCores on v7x).
    candidates = range(pack, cap_rows + 1, pack)
    even = [t for t in candidates if (-(-B // t)) % 2 == 0]
    row_tile = max(even) if even else cap_rows
    return row_tile, vmem_limit


def glsoftmax(x: jax.Array, *, row_tile: int | None = None) -> jax.Array:
    """Softmax(LNorm(x)) over the last axis of a 2D (batch, hidden) array."""
    assert x.ndim == 2, "expected (batch, hidden)"
    B, H = x.shape

    auto_tile, vmem_limit = _tiling_plan(B, H, x.dtype)
    if row_tile is None:
        row_tile = auto_tile
    grid = (pl.cdiv(B, row_tile),)             # clipped final block if row_tile doesn't divide B

    return pl.pallas_call(
        _glsoftmax_kernel,
        out_shape=jax.ShapeDtypeStruct((B, H), x.dtype),
        grid_spec=pltpu.PrefetchScalarGridSpec(
            num_scalar_prefetch=0,
            grid=grid,
            # H stays full-extent as the last (lane) dim -> lane-dense loads/stores.
            # (Optional v7x sweep once tiles are ~2 MiB: pipeline_mode=pl.Buffered(3).)
            in_specs=[pl.BlockSpec((row_tile, H), lambda i: (i, 0))],
            out_specs=pl.BlockSpec((row_tile, H), lambda i: (i, 0)),
        ),
        compiler_params=pltpu.CompilerParams(
            dimension_semantics=("parallel",),
            vmem_limit_bytes=vmem_limit,
        ),
    )(x)


def _reference(x: jax.Array) -> jax.Array:
    x = x.astype(jnp.float32)
    mean = jnp.mean(x, axis=-1, keepdims=True)
    var = jnp.mean((x - mean) ** 2, axis=-1, keepdims=True)
    xn = (x - mean) / jnp.sqrt(var + _EPS)
    return jax.nn.softmax(xn, axis=-1)


if __name__ == "__main__":
    key = jax.random.PRNGKey(0)

    # Small shape consistent with the module's forward: (batch, hidden).
    B, H = 8, 128
    x = jax.random.normal(key, (B, H), dtype=jnp.float32)
    out = jax.block_until_ready(glsoftmax(x))
    assert out.shape == (B, H) and out.dtype == x.dtype
    assert jnp.allclose(out, _reference(x), atol=1e-5, rtol=1e-4)
    assert jnp.allclose(jnp.sum(out, axis=-1), 1.0, atol=1e-5)

    # Multi-step (pipelined, "parallel") grid path via the auto tiling plan.
    k2 = jax.random.PRNGKey(1)
    x2 = jax.random.normal(k2, (96, 256), dtype=jnp.float32)
    out2 = jax.block_until_ready(glsoftmax(x2))
    assert jnp.allclose(out2, _reference(x2), atol=1e-5, rtol=1e-4)

    # Non-dividing batch: pl.cdiv grid with a clipped final block.
    k3 = jax.random.PRNGKey(2)
    x3 = jax.random.normal(k3, (100, 256), dtype=jnp.float32)
    out3 = jax.block_until_ready(glsoftmax(x3, row_tile=16))
    assert jnp.allclose(out3, _reference(x3), atol=1e-5, rtol=1e-4)

    print("KERNEL_OK")
</pallas_src>

<mosaic_0001>
module attributes {stable_mosaic.version = 11 : i64} {
  func.func @_glsoftmax_kernel(%arg0: i32, %arg1: memref<8x128xf32, #tpu.memory_space<vmem>>, %arg2: memref<8x128xf32, #tpu.memory_space<vmem>>) attributes {dimension_semantics = [#tpu.dimension_semantics<parallel>], iteration_bounds = array<i64: 1>, scalar_prefetch = 0 : i64, scratch_operands = 0 : i64, tpu.core_type = #tpu.core_type<tc>, window_params = [{transform_indices = @transform_0, window_bounds = array<i64: 8, 128>}, {transform_indices = @transform_1, window_bounds = array<i64: 8, 128>}]} {
    %c0 = arith.constant 0 : index
    %c0_0 = arith.constant 0 : index
    %0 = vector.load %arg1[%c0, %c0_0] : memref<8x128xf32, #tpu.memory_space<vmem>>, vector<8x128xf32>
    %cst = arith.constant dense<0.000000e+00> : vector<8xf32>
    %1 = vector.multi_reduction <add>, %0, %cst [1] : vector<8x128xf32> to vector<8xf32>
    %2 = vector.shape_cast %1 : vector<8xf32> to vector<8x1xf32>
    %cst_1 = arith.constant 1.280000e+02 : f32
    %3 = vector.broadcast %cst_1 : f32 to vector<8x1xf32>
    %4 = arith.divf %2, %3 : vector<8x1xf32>
    %5 = vector.broadcast %4 : vector<8x1xf32> to vector<8x128xf32>
    %6 = arith.subf %0, %5 : vector<8x128xf32>
    %7 = arith.mulf %6, %6 : vector<8x128xf32>
    %cst_2 = arith.constant dense<0.000000e+00> : vector<8xf32>
    %8 = vector.multi_reduction <add>, %7, %cst_2 [1] : vector<8x128xf32> to vector<8xf32>
    %9 = vector.shape_cast %8 : vector<8xf32> to vector<8x1xf32>
    %cst_3 = arith.constant 1.280000e+02 : f32
    %10 = vector.broadcast %cst_3 : f32 to vector<8x1xf32>
    %11 = arith.divf %9, %10 : vector<8x1xf32>
    %cst_4 = arith.constant 9.99999974E-6 : f32
    %12 = vector.broadcast %cst_4 : f32 to vector<8x1xf32>
    %13 = arith.addf %11, %12 : vector<8x1xf32>
    %14 = math.rsqrt %13 : vector<8x1xf32>
    %15 = vector.broadcast %14 : vector<8x1xf32> to vector<8x128xf32>
    %16 = arith.mulf %6, %15 : vector<8x128xf32>
    %cst_5 = arith.constant dense<0xFF800000> : vector<8xf32>
    %17 = vector.multi_reduction <maximumf>, %16, %cst_5 [1] : vector<8x128xf32> to vector<8xf32>
    %18 = vector.shape_cast %17 : vector<8xf32> to vector<8x1xf32>
    %19 = vector.broadcast %18 : vector<8x1xf32> to vector<8x128xf32>
    %20 = arith.subf %16, %19 : vector<8x128xf32>
    %21 = math.exp %20 : vector<8x128xf32>
    %cst_6 = arith.constant dense<0.000000e+00> : vector<8xf32>
    %22 = vector.multi_reduction <add>, %21, %cst_6 [1] : vector<8x128xf32> to vector<8xf32>
    %23 = vector.shape_cast %22 : vector<8xf32> to vector<8x1xf32>
    %cst_7 = arith.constant 1.000000e+00 : f32
    %24 = vector.broadcast %cst_7 : f32 to vector<8x1xf32>
    %25 = arith.divf %24, %23 : vector<8x1xf32>
    %26 = vector.broadcast %25 : vector<8x1xf32> to vector<8x128xf32>
    %27 = arith.mulf %21, %26 : vector<8x128xf32>
    %c0_8 = arith.constant 0 : index
    %c0_9 = arith.constant 0 : index
    %28 = vector.load %arg2[%c0_8, %c0_9] : memref<8x128xf32, #tpu.memory_space<vmem>>, vector<8x128xf32>
    tpu.vector_store %arg2[%c0_8, %c0_9], %27 {strides = array<i32>} : memref<8x128xf32, #tpu.memory_space<vmem>>, vector<8x128xf32>,
    return
  }
  func.func @transform_0(%arg0: i32) -> (i32, i32) {
    %c0_i32 = arith.constant 0 : i32
    %c0_i32_0 = arith.constant 0 : i32
    return %arg0, %c0_i32 : i32, i32
  }
  func.func @transform_1(%arg0: i32) -> (i32, i32) {
    %c0_i32 = arith.constant 0 : i32
    %c0_i32_0 = arith.constant 0 : i32
    return %arg0, %c0_i32 : i32, i32
  }
}

</mosaic_0001>

<llo_original>
// kernel: tpu_custom_call.1
$region0: #{tpu_custom_call.1}
  #allocation0 [shape = 'u32[]', space=smem, size = 0x4, offset = 0x4, fixed_abs, tag = 'smem constant byte address 0x4 - core index']
  #allocation1 [shape = 'u32[72,128]{1,0:T(1,128)}', space=vmem, size = 0x9000, scoped, tag = 'internal scratch']
  %s0 = inlined_call_operand.hbm [shape: f32[8,128], index: 0, kind: input, shape index: {}]
  %s1 = inlined_call_operand.hbm [shape: f32[8,128], index: 1, kind: output, shape index: {}]
  %s2 = sld [smem:[#allocation0]]
  $region18: #{tpu_custom_call.1} parent=0
    _
  %s4 = ssub.s32 1, %s2
  %s5 = scalar_select 0, %s4, %s2
  $region1: #{tpu_custom_call.1} parent=0
    #allocation2 [shape = 'u8[4096]{0}', space=vmem, size = 0x1000, scoped, tag = 'input window, operand 0, single buffered']
    #allocation3 [shape = 's32[1]{0}', space=sflag, size = 0x4, scoped, tag = 'scoped memory for tpu_custom_call.1']
    #allocation4 [shape = 's32[1]{0}', space=sflag, size = 0x4, scoped, tag = 'scoped memory for tpu_custom_call.1']
    #allocation5 [shape = 'u8[4096]{0}', space=vmem, size = 0x1000, scoped, tag = 'output window, operand 0, single buffered']
    %6 = vsyncpa [#allocation3], 0
    %7 = vsyncpa [#allocation4], 0
    // Predicated region
    $region2: #{tpu_custom_call.1} parent=1 // pred_check
      _
    $region3: #{tpu_custom_call.1} parent=1 // pred_check_branch
      %9 = sbr.rel (0) target = $region5
    $region4: #{tpu_custom_call.1} parent=1 // pred_region
      %11 = vsyncadd [#allocation3], 0
      %s13 = sshll.u32 %s0, 4
      %s14 = int_to_ptr.hbm [resolvable:$true] %s13
      %s15 = sshll.u32 [#allocation2], 4
      %s16 = int_to_ptr.vmem [resolvable:$true] %s15
      %18 = dma.hbm_to_vmem [thread:$0]  %s14, 128, %s16, [#allocation3]
    $region5: #{tpu_custom_call.1} parent=1 // pred_fallthru
      _
    // Predicated region
    $region6: #{tpu_custom_call.1} parent=1 // pred_check
      _
    $region7: #{tpu_custom_call.1} parent=1 // pred_check_branch
      %20 = sbr.rel (0) target = $region9
    $region8: #{tpu_custom_call.1} parent=1 // pred_region
      %22 = dma.done [#allocation3], 128
    $region9: #{tpu_custom_call.1} parent=1 // pred_fallthru
      _
    %v23 = vld [vmem:[#allocation2] sm:$0xff]
    %24 = vadd.xlane.f32.xlu0 %v23
    %v25 = vpop.xlane.xlu0 %24
    %v26 = vrcp.pop 128.0
    %v27 = vmul.f32 128.0, %v26
    %v28 = vsub.f32 1.0, %v27
    %v29 = vmul.f32 %v26, %v28
    %v30 = vadd.f32 %v26, %v29
    %vm31 = vweird.f32 %v26
    %v32 = vsel %vm31, %v26, %v30
    %v33 = vmul.f32 %v25, %v32
    %v34 = vsub.f32 %v23, %v33
    %v35 = vmul.f32 %v34, %v34
    %36 = vadd.xlane.f32.xlu0 %v35
    %v37 = vpop.xlane.xlu0 %36
    %v38 = vmul.f32 %v37, %v32
    %v39 = vadd.f32 %v38, 1e-05
    %v40 = vrsqrt.pop %v39
    %v41 = vmul.f32 %v40, %v39
    %v42 = vmul.f32 %v41, %v40
    %v43 = vmul.f32 0.5, %v42
    %v44 = vsub.f32 1.5, %v43
    %v45 = vmul.f32 %v40, %v44
    %vm46 = vweird.f32 %v39
    %vm47 = vweird.f32 %v40
    %vm48 = vmor %vm46, %vm47
    %v49 = vsel %vm48, %v40, %v45
    %v50 = vmul.f32 %v34, %v49
    %51 = vmax.xlane.f32.xlu0 %v50
    %v52 = vpop.xlane.xlu0 %51
    %v53 = vsub.f32 %v50, %v52
    %v54 = vmul.f32 %v53, 1.442695
    %v55 = vpow.pop %v54
    %56 = vadd.xlane.f32.xlu0 %v55
    %v57 = vpop.xlane.xlu0 %56
    %v58 = vrcp.pop %v57
    %v59 = vmul.f32 %v57, %v58
    %v60 = vsub.f32 1.0, %v59
    %v61 = vmul.f32 %v58, %v60
    %v62 = vadd.f32 %v58, %v61
    %vm63 = vweird.f32 %v57
    %vm64 = vweird.f32 %v58
    %vm65 = vmor %vm63, %vm64
    %v66 = vsel %vm65, %v58, %v62
    %v67 = vand.u32 2147483647, %v57
    %vm68 = vcmp.eq.f32.partialorder %v67, 8.507059e+37
    %v69 = vand.u32 %v57, 2147483648
    %v70 = vor.u32 1.1754944e-38, %v69
    %v71 = vsel %vm68, %v70, %v66
    %v72 = vmul.f32 1.0, %v71
    %v73 = vmul.f32 %v55, %v72
    %74 = vst [vmem:[#allocation5] sm:$0xff] %v73
    // Predicated region
    $region10: #{tpu_custom_call.1} parent=1 // pred_check
      _
    $region11: #{tpu_custom_call.1} parent=1 // pred_check_branch
      %76 = sbr.rel (0) target = $region13
    $region12: #{tpu_custom_call.1} parent=1 // pred_region
      %78 = vsyncadd [#allocation4], 0
      %s80 = sshll.u32 [#allocation5], 4
      %s81 = int_to_ptr.vmem [resolvable:$true] %s80
      %s82 = sshll.u32 %s1, 4
      %s83 = int_to_ptr.hbm [resolvable:$true] %s82
      %85 = dma.vmem_to_hbm [thread:$0]  %s81, 128, %s83, [#allocation4]
    $region13: #{tpu_custom_call.1} parent=1 // pred_fallthru
      _
    // Predicated region
    $region14: #{tpu_custom_call.1} parent=1 // pred_check
      _
    $region15: #{tpu_custom_call.1} parent=1 // pred_check_branch
      %87 = sbr.rel (0) target = $region17
    $region16: #{tpu_custom_call.1} parent=1 // pred_region
      %89 = dma.done [#allocation4], 128
    $region17: #{tpu_custom_call.1} parent=1 // pred_fallthru
      _
    %90 = vsyncpa [#allocation3], 1
    %91 = vsyncpa [#allocation4], 1

</llo_original>
